<compile_context>
chip_gen: v7x
topology: tpu7x:2x2x1
jax: 0.10.0
libtpu: 0.0.40
codegen_flags: <defaults>
</compile_context>

<pallas_src>
import jax
import jax.numpy as jnp
from jax.experimental import pallas as pl
from jax.experimental.pallas import tpu as pltpu


def _round_up(x: int, m: int) -> int:
    return ((x + m - 1) // m) * m


def _sublane_multiple(dtype) -> int:
    # 8 sublanes of 32-bit; sub-32-bit dtypes pack along sublanes.
    itemsize = jnp.dtype(dtype).itemsize
    return max(8, 32 // itemsize)


def _chomp_copy_kernel(x_ref, o_ref):
    # Input tile already covers only the kept window -> pure lane-dense copy.
    o_ref[...] = x_ref[...]


def tcn_forward(x: jax.Array, tcn_size: int,
                row_tile: int = 256, len_tile: int = 2048) -> jax.Array:
    """Pallas equivalent of `x[:, :, :-tcn_size].contiguous()` (NCL layout)."""
    if tcn_size <= 0:
        # PyTorch's x[:, :, :-0] yields an *empty* tensor; that degenerate
        # case has no useful kernel equivalent, so reject it explicitly.
        raise ValueError("tcn_size must be a positive integer")
    N, C, L = x.shape
    L_out = L - tcn_size
    if L_out <= 0:
        raise ValueError("tcn_size must be smaller than the sequence length")

    rows = N * C
    x2d = x.reshape(rows, L)  # free: contiguous collapse of (N, C)

    sub = _sublane_multiple(x.dtype)
    r_tile = min(_round_up(row_tile, sub), _round_up(rows, sub))
    l_tile = min(_round_up(len_tile, 128), _round_up(L_out, 128))

    grid = (pl.cdiv(rows, r_tile), pl.cdiv(L_out, l_tile))

    out2d = pl.pallas_call(
        _chomp_copy_kernel,
        out_shape=jax.ShapeDtypeStruct((rows, L_out), x.dtype),
        grid_spec=pltpu.PrefetchScalarGridSpec(
            num_scalar_prefetch=0,
            grid=grid,
            # Same block index for input and output: the grid covers only the
            # kept window, so the discarded tail is never read from HBM
            # (except a sub-tile sliver on the final partial L block).
            in_specs=[pl.BlockSpec((r_tile, l_tile), lambda r, l: (r, l))],
            out_specs=pl.BlockSpec((r_tile, l_tile), lambda r, l: (r, l)),
            # If profiling shows exposed DMA, add
            # pipeline_mode=pl.Buffered(3) on the input BlockSpec.
        ),
        compiler_params=pltpu.CompilerParams(
            dimension_semantics=("parallel", "parallel"),
            vmem_limit_bytes=32 * 1024 * 1024,
        ),
    )(x2d)

    return out2d.reshape(N, C, L_out)


if __name__ == "__main__":
    key = jax.random.PRNGKey(0)

    # Small shape matching the module's toy usage.
    batch, channels, length = 2, 4, 16
    tcn_size = 4
    x = jax.random.normal(key, (batch, channels, length), dtype=jnp.float32)
    out = jax.block_until_ready(tcn_forward(x, tcn_size))
    ref = x[:, :, :-tcn_size]
    assert out.shape == (batch, channels, length - tcn_size), out.shape
    assert jnp.array_equal(out, ref), "mismatch vs reference slice (small case)"

    # Modest second case forcing a multi-block grid with partial boundary
    # tiles in both row and lane dims (exercises the masked-store path).
    key2 = jax.random.PRNGKey(0)
    x2 = jax.random.normal(key2, (2, 22, 300), dtype=jnp.float32)
    out2 = jax.block_until_ready(tcn_forward(x2, 37, row_tile=8, len_tile=128))
    ref2 = x2[:, :, :-37]
    assert out2.shape == ref2.shape, out2.shape
    assert jnp.array_equal(out2, ref2), "mismatch vs reference slice (tiled case)"

    print("KERNEL_OK")
</pallas_src>

<mosaic_0001>
module attributes {stable_mosaic.version = 11 : i64} {
  func.func @_chomp_copy_kernel(%arg0: i32, %arg1: i32, %arg2: memref<8x128xf32, #tpu.memory_space<vmem>>, %arg3: memref<8x128xf32, #tpu.memory_space<vmem>>) attributes {dimension_semantics = [#tpu.dimension_semantics<parallel>, #tpu.dimension_semantics<parallel>], iteration_bounds = array<i64: 1, 1>, scalar_prefetch = 0 : i64, scratch_operands = 0 : i64, tpu.core_type = #tpu.core_type<tc>, window_params = [{transform_indices = @transform_0, window_bounds = array<i64: 8, 128>}, {transform_indices = @transform_1, window_bounds = array<i64: 8, 128>}]} {
    %c0 = arith.constant 0 : index
    %c0_0 = arith.constant 0 : index
    %0 = vector.load %arg2[%c0, %c0_0] : memref<8x128xf32, #tpu.memory_space<vmem>>, vector<8x128xf32>
    %c0_1 = arith.constant 0 : index
    %c0_2 = arith.constant 0 : index
    %1 = vector.load %arg3[%c0_1, %c0_2] : memref<8x128xf32, #tpu.memory_space<vmem>>, vector<8x128xf32>
    tpu.vector_store %arg3[%c0_1, %c0_2], %0 {strides = array<i32>} : memref<8x128xf32, #tpu.memory_space<vmem>>, vector<8x128xf32>,
    return
  }
  func.func @transform_0(%arg0: i32, %arg1: i32) -> (i32, i32) {
    %c0_i32 = arith.constant 0 : i32
    return %arg0, %arg1 : i32, i32
  }
  func.func @transform_1(%arg0: i32, %arg1: i32) -> (i32, i32) {
    %c0_i32 = arith.constant 0 : i32
    return %arg0, %arg1 : i32, i32
  }
}

</mosaic_0001>

<llo_original>
// kernel: tpu_custom_call.1
$region0: #{tpu_custom_call.1}
  #allocation0 [shape = 'u32[]', space=smem, size = 0x4, offset = 0x4, fixed_abs, tag = 'smem constant byte address 0x4 - core index']
  #allocation1 [shape = 'u32[144,128]{1,0:T(1,128)}', space=vmem, size = 0x12000, scoped, tag = 'internal scratch']
  %s0 = inlined_call_operand.hbm [shape: f32[8,16], index: 0, kind: input, shape index: {}]
  %s1 = inlined_call_operand.hbm [shape: f32[8,12], index: 1, kind: output, shape index: {}]
  %s2 = sld [smem:[#allocation0]]
  $region18: #{tpu_custom_call.1} parent=0
    _
  %s4 = ssub.s32 1, %s2
  %s5 = scalar_select 0, %s4, %s2
  $region1: #{tpu_custom_call.1} parent=0
    #allocation2 [shape = 'u8[4096]{0}', space=vmem, size = 0x1000, scoped, tag = 'input window, operand 0, single buffered']
    #allocation3 [shape = 's32[1]{0}', space=sflag, size = 0x4, scoped, tag = 'scoped memory for tpu_custom_call.1']
    #allocation4 [shape = 's32[1]{0}', space=sflag, size = 0x4, scoped, tag = 'scoped memory for tpu_custom_call.1']
    #allocation5 [shape = 'u8[4096]{0}', space=vmem, size = 0x1000, scoped, tag = 'output window, operand 0, single buffered']
    %6 = vsyncpa [#allocation3], 0
    %7 = vsyncpa [#allocation4], 0
    // Predicated region
    $region2: #{tpu_custom_call.1} parent=1 // pred_check
      _
    $region3: #{tpu_custom_call.1} parent=1 // pred_check_branch
      %9 = sbr.rel (0) target = $region5
    $region4: #{tpu_custom_call.1} parent=1 // pred_region
      %s11 = ssub.s32 128, 128
      %12 = vsyncadd [#allocation3], %s11
      %s14 = sshll.u32 [#allocation2], 4
      %s15 = int_to_ptr.vmem [resolvable:$true] %s14
      %17 = dma.hbm_to_vmem [thread:$0]  %s0, 128, %s15, [#allocation3]
    $region5: #{tpu_custom_call.1} parent=1 // pred_fallthru
      _
    // Predicated region
    $region6: #{tpu_custom_call.1} parent=1 // pred_check
      _
    $region7: #{tpu_custom_call.1} parent=1 // pred_check_branch
      %19 = sbr.rel (0) target = $region9
    $region8: #{tpu_custom_call.1} parent=1 // pred_region
      %20 = dma.done [#allocation3], 128
    $region9: #{tpu_custom_call.1} parent=1 // pred_fallthru
      _
    %v21 = vld [vmem:[#allocation2] sm:$0xff]
    %22 = vst [vmem:[#allocation5] sm:$0xff] %v21
    // Predicated region
    $region10: #{tpu_custom_call.1} parent=1 // pred_check
      _
    $region11: #{tpu_custom_call.1} parent=1 // pred_check_branch
      %24 = sbr.rel (0) target = $region13
    $region12: #{tpu_custom_call.1} parent=1 // pred_region
      %s26 = ssub.s32 128, 128
      %27 = vsyncadd [#allocation4], %s26
      %s29 = sshll.u32 [#allocation5], 4
      %s30 = int_to_ptr.vmem [resolvable:$true] %s29
      %32 = dma.vmem_to_hbm [thread:$0]  %s30, 128, %s1, [#allocation4]
    $region13: #{tpu_custom_call.1} parent=1 // pred_fallthru
      _
    // Predicated region
    $region14: #{tpu_custom_call.1} parent=1 // pred_check
      _
    $region15: #{tpu_custom_call.1} parent=1 // pred_check_branch
      %34 = sbr.rel (0) target = $region17
    $region16: #{tpu_custom_call.1} parent=1 // pred_region
      %35 = dma.done [#allocation4], 128
    $region17: #{tpu_custom_call.1} parent=1 // pred_fallthru
      _
    %36 = vsyncpa [#allocation3], 1
    %37 = vsyncpa [#allocation4], 1

</llo_original>
